<compile_context>
chip_gen: v6e
topology: v6e:2x2x1
jax: 0.10.0
libtpu: 0.0.40
codegen_flags: <defaults>
</compile_context>

<pallas_src>
from typing import NamedTuple

import jax
import jax.numpy as jnp
from jax.experimental import pallas as pl
from jax.experimental.pallas import tpu as pltpu


# ----------------------------------------------------------------------------
# Kernels: y_tile = x_tile [tm, tk] @ w_tile [tk, tn]  (weight pre-transposed)
# ----------------------------------------------------------------------------
def _matmul_kernel_single(x_ref, w_ref, o_ref):
    """Whole K in one tile: one MXU pass, no accumulator."""
    ct = jnp.promote_types(x_ref.dtype, w_ref.dtype)
    o_ref[...] = jnp.dot(
        x_ref[...].astype(ct), w_ref[...].astype(ct),
        preferred_element_type=jnp.float32,
    ).astype(o_ref.dtype)


def _matmul_kernel_kloop_f32(x_ref, w_ref, o_ref):
    """K-tiled reduction, f32 output: accumulate directly into o_ref.
    Valid only because the output index_map ignores k and k is the innermost,
    'arbitrary' grid axis (tile stays VMEM-resident across the reduction)."""
    @pl.when(pl.program_id(2) == 0)
    def _():
        o_ref[...] = jnp.zeros_like(o_ref)

    ct = jnp.promote_types(x_ref.dtype, w_ref.dtype)
    o_ref[...] += jnp.dot(
        x_ref[...].astype(ct), w_ref[...].astype(ct),
        preferred_element_type=jnp.float32)


def _matmul_kernel_kloop_scratch(x_ref, w_ref, o_ref, acc_ref):
    """K-tiled reduction, narrow output dtype: f32 scratch accumulator."""
    @pl.when(pl.program_id(2) == 0)
    def _():
        acc_ref[...] = jnp.zeros_like(acc_ref)

    ct = jnp.promote_types(x_ref.dtype, w_ref.dtype)
    acc_ref[...] += jnp.dot(
        x_ref[...].astype(ct), w_ref[...].astype(ct),
        preferred_element_type=jnp.float32)

    @pl.when(pl.program_id(2) == pl.num_programs(2) - 1)
    def _():
        o_ref[...] = acc_ref[...].astype(o_ref.dtype)


# ----------------------------------------------------------------------------
# Helpers
# ----------------------------------------------------------------------------
def _round_up(v, m):
    return ((v + m - 1) // m) * m


def _sublane(dtype):
    return {4: 8, 2: 16, 1: 32}.get(jnp.dtype(dtype).itemsize, 8)


def _pick_tile(dim, unit, target, min_tiles=1):
    """Largest multiple of `unit` that divides round_up(dim, unit), does not
    exceed `target`, and (if possible) leaves at least `min_tiles` grid steps.
    Guarantees exact divisibility -> no masked stores, minimal padding."""
    padded = _round_up(max(int(dim), 1), unit)
    m = padded // unit
    candidates = [unit * d for d in range(1, m + 1)
                  if m % d == 0 and unit * d <= target]
    good = [t for t in candidates if padded // t >= min_tiles]
    tile = max(good) if good else max(candidates)
    return tile, padded


# ----------------------------------------------------------------------------
# One-time weight preparation (parameter-load time, NOT per call)
# ----------------------------------------------------------------------------
class PreparedUserEbWeight(NamedTuple):
    w_t: jax.Array   # [K_p, N_p] = padded weight.T, kernel-ready layout
    n: int           # original output dim (UserEb `dim`)
    k: int           # original input dim (UserEb `num_users`)
    tn: int
    tk: int


def prepare_user_eb_weight(weight, *, dtype=None, tn_target=512, tk_target=None):
    """Cache the weight in its kernel-ready layout once:
       - optional cast (e.g. bf16 halves HBM traffic in the small-batch regime),
       - pad N / K up to exact tile multiples,
       - transpose to [K_p, N_p] so forward runs a plain [M,K]x[K,N] MXU dot.
    """
    N, K = weight.shape  # PyTorch layout: [dim, num_users]
    if dtype is not None:
        weight = weight.astype(dtype)
    w_item = jnp.dtype(weight.dtype).itemsize
    if tk_target is None:
        tk_target = 2048 if w_item <= 2 else 1024
    # Prefer >=2 N tiles when N allows, so v7x's second TensorCore has a
    # 'parallel' axis to shard even when the batch fits a single M tile.
    tn, N_p = _pick_tile(N, 128, tn_target, min_tiles=2)
    tk, K_p = _pick_tile(K, 128, tk_target, min_tiles=1)
    w_t = weight.T
    if (K_p, N_p) != (K, N):
        w_t = jnp.pad(w_t, ((0, K_p - K), (0, N_p - N)))
    return PreparedUserEbWeight(jnp.asarray(w_t), N, K, tn, tk)


# ----------------------------------------------------------------------------
# Forward
# ----------------------------------------------------------------------------
def user_eb_forward(x, prepared: PreparedUserEbWeight):
    """y = x @ weight.T  (nn.Linear, bias=False), weight pre-prepared.

    x: [B, num_users]  ->  [B, dim]
    """
    B, K = x.shape
    if K != prepared.k:
        raise ValueError(f"num_users mismatch: x has {K}, weight has {prepared.k}")

    w_t = prepared.w_t
    K_p, N_p = w_t.shape
    tn, tk = prepared.tn, prepared.tk

    out_dtype = jnp.promote_types(x.dtype, w_t.dtype)
    sub_m = max(_sublane(x.dtype), _sublane(out_dtype))
    tm, B_p = _pick_tile(B, sub_m, 256)

    # Per-call padding only for the (small) activation, only when needed.
    if (B_p, K_p) != (B, K):
        x = jnp.pad(x, ((0, B_p - B), (0, K_p - K)))

    m_tiles, n_tiles, k_tiles = B_p // tm, N_p // tn, K_p // tk

    x_item = jnp.dtype(x.dtype).itemsize
    w_item = jnp.dtype(w_t.dtype).itemsize
    o_item = jnp.dtype(out_dtype).itemsize

    # Actual traffic: x is re-streamed once per N tile, W once per M tile.
    cost = pl.CostEstimate(
        flops=2 * B_p * N_p * K_p,
        transcendentals=0,
        bytes_accessed=(B_p * K_p * x_item * n_tiles
                        + K_p * N_p * w_item * m_tiles
                        + B_p * N_p * o_item),
    )

    use_scratch = (k_tiles > 1) and (out_dtype != jnp.float32)
    footprint = (2 * (tm * tk * x_item + tk * tn * w_item)   # double-buffered inputs
                 + 2 * tm * tn * o_item                      # output buffers
                 + (tm * tn * 4 if use_scratch else 0))
    # Safe on v5e (16 MiB scoped default), v6e (32 MiB) and v7x (32 MiB / 64 MiB phys).
    vmem_limit = int(min(max(footprint * 3 // 2, 16 * 1024 * 1024),
                         32 * 1024 * 1024))

    out_shape = jax.ShapeDtypeStruct((B_p, N_p), out_dtype)

    if k_tiles == 1:
        # ---- fast path: single K tile, no reduction grid axis ----
        grid_spec = pltpu.PrefetchScalarGridSpec(
            num_scalar_prefetch=0,
            grid=(m_tiles, n_tiles),
            in_specs=[
                pl.BlockSpec((tm, tk), lambda i, j: (i, 0)),
                pl.BlockSpec((tk, tn), lambda i, j: (0, j)),
            ],
            out_specs=pl.BlockSpec((tm, tn), lambda i, j: (i, j)),
        )
        kernel = _matmul_kernel_single
        dims = ("parallel", "parallel")
    else:
        # ---- K-tiled reduction (K axis last, "arbitrary") ----
        kernel = (_matmul_kernel_kloop_scratch if use_scratch
                  else _matmul_kernel_kloop_f32)
        scratch = [pltpu.VMEM((tm, tn), jnp.float32)] if use_scratch else []
        grid_spec = pltpu.PrefetchScalarGridSpec(
            num_scalar_prefetch=0,
            grid=(m_tiles, n_tiles, k_tiles),
            in_specs=[
                pl.BlockSpec((tm, tk), lambda i, j, k: (i, k)),
                pl.BlockSpec((tk, tn), lambda i, j, k: (k, j)),
            ],
            out_specs=pl.BlockSpec((tm, tn), lambda i, j, k: (i, j)),
            scratch_shapes=scratch,
        )
        dims = ("parallel", "parallel", "arbitrary")

    y_p = pl.pallas_call(
        kernel,
        out_shape=out_shape,
        grid_spec=grid_spec,
        compiler_params=pltpu.CompilerParams(
            dimension_semantics=dims, vmem_limit_bytes=vmem_limit),
        cost_estimate=cost,
    )(x, w_t)

    # Slice only when B or N were actually padded (K-only padding needs none).
    if (B_p, N_p) != (B, prepared.n):
        y_p = y_p[:B, :prepared.n]
    return y_p


# ----------------------------------------------------------------------------
# Demo / correctness checks
# ----------------------------------------------------------------------------
if __name__ == "__main__":
    key = jax.random.PRNGKey(0)
    k_w, k_x, k_w2, k_x2 = jax.random.split(key, 4)

    # ---- main demo: UserEb shapes (num_users=256, dim=128, batch=8), f32 ----
    num_users, dim, batch = 256, 128, 8
    # init_weights(): normal, std=0.01
    weight = 0.01 * jax.random.normal(k_w, (dim, num_users), dtype=jnp.float32)
    x = jax.random.normal(k_x, (batch, num_users), dtype=jnp.float32)

    prep = prepare_user_eb_weight(weight)                 # one-time prep
    y = jax.block_until_ready(user_eb_forward(x, prep))   # single-K fast path
    assert y.shape == (batch, dim)
    assert jnp.allclose(y, x @ weight.T, atol=1e-5, rtol=1e-5)

    # ---- ragged shapes: K-tiled f32 in-place accumulation path ----
    nu2, dim2, b2 = 300, 200, 5
    w2 = 0.01 * jax.random.normal(k_w2, (dim2, nu2), dtype=jnp.float32)
    x2 = jax.random.normal(k_x2, (b2, nu2), dtype=jnp.float32)
    prep2 = prepare_user_eb_weight(w2, tn_target=128, tk_target=128)
    y2 = jax.block_until_ready(user_eb_forward(x2, prep2))
    assert y2.shape == (b2, dim2)
    assert jnp.allclose(y2, x2 @ w2.T, atol=1e-5, rtol=1e-5)

    # ---- bf16 weight (recommended production config: halves weight HBM bytes) ----
    prep_bf16 = prepare_user_eb_weight(weight, dtype=jnp.bfloat16)
    y3 = jax.block_until_ready(user_eb_forward(x, prep_bf16))
    ref3 = x @ weight.astype(jnp.bfloat16).astype(jnp.float32).T
    assert y3.shape == (batch, dim) and y3.dtype == jnp.float32
    assert jnp.allclose(y3, ref3, atol=5e-3, rtol=5e-2)

    # ---- bf16 activation + bf16 weight: K-tiled scratch-accumulator path ----
    x4 = x.astype(jnp.bfloat16)
    prep4 = prepare_user_eb_weight(weight, dtype=jnp.bfloat16, tk_target=128)
    y4 = jax.block_until_ready(user_eb_forward(x4, prep4))
    assert y4.shape == (batch, dim) and y4.dtype == jnp.bfloat16
    assert jnp.allclose(y4.astype(jnp.float32), ref3, atol=2e-2, rtol=5e-2)

    print("KERNEL_OK")
</pallas_src>

<mosaic_0001>
module attributes {stable_mosaic.version = 11 : i64} {
  func.func @_matmul_kernel_single(%arg0: i32, %arg1: i32, %arg2: memref<8x256xf32, #tpu.memory_space<vmem>>, %arg3: memref<256x128xf32, #tpu.memory_space<vmem>>, %arg4: memref<8x128xf32, #tpu.memory_space<vmem>>) attributes {dimension_semantics = [#tpu.dimension_semantics<parallel>, #tpu.dimension_semantics<parallel>], iteration_bounds = array<i64: 1, 1>, scalar_prefetch = 0 : i64, scratch_operands = 0 : i64, tpu.core_type = #tpu.core_type<tc>, window_params = [{transform_indices = @transform_0, window_bounds = array<i64: 8, 256>}, {transform_indices = @transform_1, window_bounds = array<i64: 256, 128>}, {transform_indices = @transform_2, window_bounds = array<i64: 8, 128>}]} {
    %c0 = arith.constant 0 : index
    %c0_0 = arith.constant 0 : index
    %0 = vector.load %arg2[%c0, %c0_0] : memref<8x256xf32, #tpu.memory_space<vmem>>, vector<8x256xf32>
    %c0_1 = arith.constant 0 : index
    %c0_2 = arith.constant 0 : index
    %1 = vector.load %arg3[%c0_1, %c0_2] : memref<256x128xf32, #tpu.memory_space<vmem>>, vector<256x128xf32>
    %cst = arith.constant dense<0.000000e+00> : vector<8x128xf32>
    %2 = tpu.matmul %0, %1, %cst {dimension_numbers = #tpu.dot_dimension_numbers<[1], [0], [0], [1], [0, 0, 1, 1], [], []>} : vector<8x256xf32>, vector<256x128xf32>, vector<8x128xf32> -> vector<8x128xf32>
    %c0_3 = arith.constant 0 : index
    %c0_4 = arith.constant 0 : index
    %3 = vector.load %arg4[%c0_3, %c0_4] : memref<8x128xf32, #tpu.memory_space<vmem>>, vector<8x128xf32>
    tpu.vector_store %arg4[%c0_3, %c0_4], %2 {strides = array<i32>} : memref<8x128xf32, #tpu.memory_space<vmem>>, vector<8x128xf32>,
    return
  }
  func.func @transform_0(%arg0: i32, %arg1: i32) -> (i32, i32) {
    %c0_i32 = arith.constant 0 : i32
    %c0_i32_0 = arith.constant 0 : i32
    return %arg0, %c0_i32 : i32, i32
  }
  func.func @transform_1(%arg0: i32, %arg1: i32) -> (i32, i32) {
    %c0_i32 = arith.constant 0 : i32
    %c0_i32_0 = arith.constant 0 : i32
    return %c0_i32, %arg1 : i32, i32
  }
  func.func @transform_2(%arg0: i32, %arg1: i32) -> (i32, i32) {
    %c0_i32 = arith.constant 0 : i32
    return %arg0, %arg1 : i32, i32
  }
}

</mosaic_0001>

<llo_original>
// kernel: tpu_custom_call.1
$region0: #{tpu_custom_call.1}
  #allocation0 [shape = 'u32[]', space=smem, size = 0x4, offset = 0x4, fixed_abs, tag = 'smem constant byte address 0x4 - core index']
  #allocation1 [shape = 'u32[144,128]{1,0:T(1,128)}', space=vmem, size = 0x12000, scoped, tag = 'internal scratch']
  %s0 = inlined_call_operand.hbm [shape: f32[8,256], index: 0, kind: input, shape index: {}]
  %s1 = inlined_call_operand.hbm [shape: f32[256,128], index: 1, kind: input, shape index: {}]
  %s2 = inlined_call_operand.hbm [shape: f32[8,128], index: 2, kind: output, shape index: {}]
  %s3 = sld [smem:[#allocation0]]
  $region26: #{tpu_custom_call.1} parent=0
    _
  %s5 = ssub.s32 1, %s3
  %s6 = scalar_select 0, %s5, %s3
  $region1: #{tpu_custom_call.1} parent=0
    #allocation2 [shape = 'u8[8192]{0}', space=vmem, size = 0x2000, scoped, tag = 'input window, operand 0, single buffered']
    #allocation3 [shape = 's32[1]{0}', space=sflag, size = 0x4, scoped, tag = 'scoped memory for tpu_custom_call.1']
    #allocation4 [shape = 's32[1]{0}', space=sflag, size = 0x4, scoped, tag = 'scoped memory for tpu_custom_call.1']
    #allocation5 [shape = 'u8[131072]{0}', space=vmem, size = 0x20000, scoped, tag = 'input window, operand 1, single buffered']
    #allocation6 [shape = 's32[1]{0}', space=sflag, size = 0x4, scoped, tag = 'scoped memory for tpu_custom_call.1']
    #allocation7 [shape = 'u8[4096]{0}', space=vmem, size = 0x1000, scoped, tag = 'output window, operand 0, single buffered']
    %7 = vsyncpa [#allocation3], 0
    %8 = vsyncpa [#allocation6], 0
    %9 = vsyncpa [#allocation4], 0
    // Predicated region
    $region2: #{tpu_custom_call.1} parent=1 // pred_check
      _
    $region3: #{tpu_custom_call.1} parent=1 // pred_check_branch
      %11 = sbr.rel (0) target = $region5
    $region4: #{tpu_custom_call.1} parent=1 // pred_region
      %s13 = ssub.s32 256, 256
      %14 = vsyncadd [#allocation3], %s13
      %s16 = sshll.u32 [#allocation2], 4
      %s17 = int_to_ptr.vmem [resolvable:$true] %s16
      %19 = dma.hbm_to_vmem [thread:$0]  %s0, 256, %s17, [#allocation3]
    $region5: #{tpu_custom_call.1} parent=1 // pred_fallthru
      _
    // Predicated region
    $region6: #{tpu_custom_call.1} parent=1 // pred_check
      _
    $region7: #{tpu_custom_call.1} parent=1 // pred_check_branch
      %21 = sbr.rel (0) target = $region9
    $region8: #{tpu_custom_call.1} parent=1 // pred_region
      %s23 = ssub.s32 4096, 4096
      %24 = vsyncadd [#allocation6], %s23
      %s25 = sshll.u32 [#allocation5], 4
      %s26 = int_to_ptr.vmem [resolvable:$true] %s25
      %31 = dma.hbm_to_vmem [thread:$0]  %s1, 4096, %s26, [#allocation6], 128, 128, 8
    $region9: #{tpu_custom_call.1} parent=1 // pred_fallthru
      _
    // Predicated region
    $region10: #{tpu_custom_call.1} parent=1 // pred_check
      _
    $region11: #{tpu_custom_call.1} parent=1 // pred_check_branch
      %33 = sbr.rel (0) target = $region13
    $region12: #{tpu_custom_call.1} parent=1 // pred_region
      %34 = dma.done [#allocation3], 256
    $region13: #{tpu_custom_call.1} parent=1 // pred_fallthru
      _
    // Predicated region
    $region14: #{tpu_custom_call.1} parent=1 // pred_check
      _
    $region15: #{tpu_custom_call.1} parent=1 // pred_check_branch
      %36 = sbr.rel (0) target = $region17
    $region16: #{tpu_custom_call.1} parent=1 // pred_region
      %37 = dma.done [#allocation6], 4096
    $region17: #{tpu_custom_call.1} parent=1 // pred_fallthru
      _
    %v38 = vld [vmem:[#allocation2] sm:$0xff]
    %v39 = vld [vmem:[#allocation2 + $0x8] sm:$0xff]
    %v40 = vld [vmem:[#allocation5] sm:$0xff]
    %v41 = vld [vmem:[#allocation5 + $0x8] sm:$0xff]
    %v42 = vld [vmem:[#allocation5 + $0x10] sm:$0xff]
    %v43 = vld [vmem:[#allocation5 + $0x18] sm:$0xff]
    %v44 = vld [vmem:[#allocation5 + $0x20] sm:$0xff]
    %v45 = vld [vmem:[#allocation5 + $0x28] sm:$0xff]
    %v46 = vld [vmem:[#allocation5 + $0x30] sm:$0xff]
    %v47 = vld [vmem:[#allocation5 + $0x38] sm:$0xff]
    %v48 = vld [vmem:[#allocation5 + $0x40] sm:$0xff]
    %v49 = vld [vmem:[#allocation5 + $0x48] sm:$0xff]
    %v50 = vld [vmem:[#allocation5 + $0x50] sm:$0xff]
    %v51 = vld [vmem:[#allocation5 + $0x58] sm:$0xff]
    %v52 = vld [vmem:[#allocation5 + $0x60] sm:$0xff]
    %v53 = vld [vmem:[#allocation5 + $0x68] sm:$0xff]
    %v54 = vld [vmem:[#allocation5 + $0x70] sm:$0xff]
    %v55 = vld [vmem:[#allocation5 + $0x78] sm:$0xff]
    %v56 = vld [vmem:[#allocation5 + $0x80] sm:$0xff]
    %v57 = vld [vmem:[#allocation5 + $0x88] sm:$0xff]
    %v58 = vld [vmem:[#allocation5 + $0x90] sm:$0xff]
    %v59 = vld [vmem:[#allocation5 + $0x98] sm:$0xff]
    %v60 = vld [vmem:[#allocation5 + $0xa0] sm:$0xff]
    %v61 = vld [vmem:[#allocation5 + $0xa8] sm:$0xff]
    %v62 = vld [vmem:[#allocation5 + $0xb0] sm:$0xff]
    %v63 = vld [vmem:[#allocation5 + $0xb8] sm:$0xff]
    %v64 = vld [vmem:[#allocation5 + $0xc0] sm:$0xff]
    %v65 = vld [vmem:[#allocation5 + $0xc8] sm:$0xff]
    %v66 = vld [vmem:[#allocation5 + $0xd0] sm:$0xff]
    %v67 = vld [vmem:[#allocation5 + $0xd8] sm:$0xff]
    %v68 = vld [vmem:[#allocation5 + $0xe0] sm:$0xff]
    %v69 = vld [vmem:[#allocation5 + $0xe8] sm:$0xff]
    %v70 = vld [vmem:[#allocation5 + $0xf0] sm:$0xff]
    %v71 = vld [vmem:[#allocation5 + $0xf8] sm:$0xff]
    %72 = vmatprep.subr.mxu0 0.0
    %73 = vmatpush1.msra.mxu0 %v55
    %74 = vmatprep.subr.mxu0 0.0
    %75 = vmatpush1.msra.mxu0 %v54
    %76 = vmatprep.subr.mxu0 0.0
    %77 = vmatpush1.msra.mxu0 %v53
    %78 = vmatprep.subr.mxu0 0.0
    %79 = vmatpush1.msra.mxu0 %v52
    %80 = vmatprep.subr.mxu0 0.0
    %81 = vmatpush1.msra.mxu0 %v51
    %82 = vmatprep.subr.mxu0 0.0
    %83 = vmatpush1.msra.mxu0 %v50
    %84 = vmatprep.subr.mxu0 0.0
    %85 = vmatpush1.msra.mxu0 %v49
    %86 = vmatprep.subr.mxu0 0.0
    %87 = vmatpush1.msra.mxu0 %v48
    %88 = vmatprep.subr.mxu0 0.0
    %89 = vmatpush1.msra.mxu0 %v47
    %90 = vmatprep.subr.mxu0 0.0
    %91 = vmatpush1.msra.mxu0 %v46
    %92 = vmatprep.subr.mxu0 0.0
    %93 = vmatpush1.msra.mxu0 %v45
    %94 = vmatprep.subr.mxu0 0.0
    %95 = vmatpush1.msra.mxu0 %v44
    %96 = vmatprep.subr.mxu0 0.0
    %97 = vmatpush1.msra.mxu0 %v43
    %98 = vmatprep.subr.mxu0 0.0
    %99 = vmatpush1.msra.mxu0 %v42
    %100 = vmatprep.subr.mxu0 0.0
    %101 = vmatpush1.msra.mxu0 %v41
    %102 = vmatprep.subr.mxu0 0.0
    %103 = vmatpush1.msra.mxu0 %v40
    %104 = vmatprep.subr.mxu0 0.0
    %105 = vmatpush2.msra.mxu0 %v71
    %106 = vmatprep.subr.mxu0 0.0
    %107 = vmatpush2.msra.mxu0 %v70
    %108 = vmatprep.subr.mxu0 0.0
    %109 = vmatpush2.msra.mxu0 %v69
    %110 = vmatprep.subr.mxu0 0.0
    %111 = vmatpush2.msra.mxu0 %v68
    %112 = vmatprep.subr.mxu0 0.0
    %113 = vmatpush2.msra.mxu0 %v67
    %114 = vmatprep.subr.mxu0 0.0
    %115 = vmatpush2.msra.mxu0 %v66
    %116 = vmatprep.subr.mxu0 0.0
    %117 = vmatpush2.msra.mxu0 %v65
    %118 = vmatprep.subr.mxu0 0.0
    %119 = vmatpush2.msra.mxu0 %v64
    %120 = vmatprep.subr.mxu0 0.0
    %121 = vmatpush2.msra.mxu0 %v63
    %122 = vmatprep.subr.mxu0 0.0
    %123 = vmatpush2.msra.mxu0 %v62
    %124 = vmatprep.subr.mxu0 0.0
    %125 = vmatpush2.msra.mxu0 %v61
    %126 = vmatprep.subr.mxu0 0.0
    %127 = vmatpush2.msra.mxu0 %v60
    %128 = vmatprep.subr.mxu0 0.0
    %129 = vmatpush2.msra.mxu0 %v59
    %130 = vmatprep.subr.mxu0 0.0
    %131 = vmatpush2.msra.mxu0 %v58
    %132 = vmatprep.subr.mxu0 0.0
    %133 = vmatpush2.msra.mxu0 %v57
    %134 = vmatprep.subr.mxu0 0.0
    %135 = vmatpush2.msra.mxu0 %v56
    %136 = vmatprep.mubr.f32.mxu0 %v39
    %137 = vmatmul.mubr.f32.gmra.mxu0 %v38
    %v138 = vpop.f32.mrf.mxu0
    %v139 = vadd.f32 0.0, %v138
    %v140 = vpop.f32.mrf.mxu0
    %141 = vdwg.mxu0
    %142 = vst [vmem:[#allocation7] sm:$0xff] %v139
    // Predicated region
    $region18: #{tpu_custom_call.1} parent=1 // pred_check
      _
    $region19: #{tpu_custom_call.1} parent=1 // pred_check_branch
      %144 = sbr.rel (0) target = $region21
    $region20: #{tpu_custom_call.1} parent=1 // pred_region
      %s146 = ssub.s32 128, 128
      %147 = vsyncadd [#allocation4], %s146
      %s149 = sshll.u32 [#allocation7], 4
      %s150 = int_to_ptr.vmem [resolvable:$true] %s149
      %152 = dma.vmem_to_hbm [thread:$0]  %s150, 128, %s2, [#allocation4]
    $region21: #{tpu_custom_call.1} parent=1 // pred_fallthru
      _
    // Predicated region
    $region22: #{tpu_custom_call.1} parent=1 // pred_check
      _
    $region23: #{tpu_custom_call.1} parent=1 // pred_check_branch
      %154 = sbr.rel (0) target = $region25
    $region24: #{tpu_custom_call.1} parent=1 // pred_region
      %155 = dma.done [#allocation4], 128
    $region25: #{tpu_custom_call.1} parent=1 // pred_fallthru
      _
    %156 = vsyncpa [#allocation3], 1
    %157 = vsyncpa [#allocation6], 1
    %158 = vsyncpa [#allocation4], 1

</llo_original>
